<compile_context>
chip_gen: v7x
topology: tpu7x:2x2x1
jax: 0.10.0
libtpu: 0.0.40
codegen_flags: <defaults>
</compile_context>

<pallas_src>
import jax
import jax.numpy as jnp
from jax.experimental import pallas as pl
from jax.experimental.pallas import tpu as pltpu

HIDDEN1 = 50
HIDDEN2 = 50

_LANE = 128       # lane width: padded (hidden) feature dims are multiples of this
_SUBLANE = 8      # sublane width: batch tile must be a multiple of this
TILE_B_MAX = 2048  # max batch tile (few MiB of VMEM even at 2048 -> fits v5e/v6e/v7x)
MIN_GRID = 2       # >= 2 (even) grid steps so "parallel" spans both v7x TensorCores


def _round_up(n, m):
    return ((n + m - 1) // m) * m


def _default_tiling(B):
    """Adaptive batch tiling: even #tiles >= 2, bounded padding waste."""
    n_tiles = max(MIN_GRID, pl.cdiv(B, TILE_B_MAX))
    n_tiles = _round_up(n_tiles, MIN_GRID)              # even -> no straggler TC (v7x)
    tile_b = _round_up(pl.cdiv(B, n_tiles), _SUBLANE)
    b_pad = n_tiles * tile_b
    return tile_b, b_pad


# ---------------------------------------------------------------------------
# Kernel: one batch tile of the fused 3-layer MLP.
#   x_ref : [tile_b, in_dim]   (f32 or bf16; cast to bf16 here)
#   w1    : [in_dim, h1_pad]   bf16      b1: [1, h1_pad]  f32
#   w2    : [h1_pad, h2_pad]   bf16      b2: [1, h2_pad]  f32
#   w3    : [h2_pad, out_dim]  bf16      b3: [1, out_dim] f32
#   o_ref : [tile_b, out_dim]  f32   (true output width -> minimal HBM writeback)
# ---------------------------------------------------------------------------
def _mlp_kernel(x_ref, w1_ref, b1_ref, w2_ref, b2_ref, w3_ref, b3_ref, o_ref):
    x = x_ref[...].astype(jnp.bfloat16)

    # fc1 + ReLU  (bf16 MXU operands, f32 accumulate / elementwise)
    h1 = jnp.dot(x, w1_ref[...], preferred_element_type=jnp.float32) + b1_ref[...]
    h1 = jnp.maximum(h1, 0.0)

    # dropout (eval mode -> identity)

    # fc2 + ReLU
    h2 = jnp.dot(h1.astype(jnp.bfloat16), w2_ref[...],
                 preferred_element_type=jnp.float32) + b2_ref[...]
    h2 = jnp.maximum(h2, 0.0)

    # dropout (eval mode -> identity)

    # fc3 (no activation), written at true output width
    out = jnp.dot(h2.astype(jnp.bfloat16), w3_ref[...],
                  preferred_element_type=jnp.float32) + b3_ref[...]
    o_ref[...] = out


# ---------------------------------------------------------------------------
# Parameter init (PyTorch nn.Linear-style U(-1/sqrt(fan_in), 1/sqrt(fan_in))).
# Weights stored as [in, out] (transposed vs. PyTorch's [out, in]).
# ---------------------------------------------------------------------------
def init_params(key, input_num, output_num):
    ks = jax.random.split(key, 6)

    def linear(kw, kb, fan_in, fan_out):
        bound = 1.0 / jnp.sqrt(fan_in)
        w = jax.random.uniform(kw, (fan_in, fan_out), jnp.float32, -bound, bound)
        b = jax.random.uniform(kb, (1, fan_out), jnp.float32, -bound, bound)
        return w, b

    w1, b1 = linear(ks[0], ks[1], input_num, HIDDEN1)
    w2, b2 = linear(ks[2], ks[3], HIDDEN1, HIDDEN2)
    w3, b3 = linear(ks[4], ks[5], HIDDEN2, output_num)
    return {"w1": w1, "b1": b1, "w2": w2, "b2": b2, "w3": w3, "b3": b3}


def pack_params(params):
    """Pad ONLY the hidden dims to multiples of 128; cast weights to bf16 (one-time).

    Input (K of fc1) and output (N of fc3) dims are kept at their true sizes so the
    kernel streams exactly the real input/output bytes.
    """
    in_dim = params["w1"].shape[0]
    out_dim = params["w3"].shape[1]
    h1_pad = _round_up(params["w1"].shape[1], _LANE)
    h2_pad = _round_up(params["w2"].shape[1], _LANE)

    def pad_w(w, rows, cols):
        return jnp.zeros((rows, cols), jnp.float32).at[: w.shape[0], : w.shape[1]].set(w)

    def pad_b(b, cols):
        return jnp.zeros((1, cols), jnp.float32).at[:, : b.shape[1]].set(b)

    packed = {
        "w1": pad_w(params["w1"], in_dim, h1_pad).astype(jnp.bfloat16),
        "b1": pad_b(params["b1"], h1_pad),
        "w2": pad_w(params["w2"], h1_pad, h2_pad).astype(jnp.bfloat16),
        "b2": pad_b(params["b2"], h2_pad),
        "w3": pad_w(params["w3"], h2_pad, out_dim).astype(jnp.bfloat16),
        "b3": pad_b(params["b3"], out_dim),
    }
    meta = dict(in_dim=in_dim, out_dim=out_dim, h1_pad=h1_pad, h2_pad=h2_pad)
    return packed, meta


# ---------------------------------------------------------------------------
# Wrapper: (maybe) pad batch rows, run the batch-tiled fused kernel, slice batch pad.
# ---------------------------------------------------------------------------
def mlp_forward(x, packed, meta, tile_b=None):
    B, in_dim = x.shape
    assert in_dim == meta["in_dim"]
    out_dim = meta["out_dim"]
    h1_pad, h2_pad = meta["h1_pad"], meta["h2_pad"]

    if tile_b is None:
        tile_b, b_pad = _default_tiling(B)
    else:
        tile_b = _round_up(tile_b, _SUBLANE)
        b_pad = _round_up(B, tile_b)

    if b_pad == B:
        # No batch padding needed: stream x as-is (kernel casts to bf16).
        x_in = x
    else:
        # Pad batch rows; fuse the bf16 cast into the same op to halve the copy traffic.
        x_in = jnp.zeros((b_pad, in_dim), jnp.bfloat16).at[:B].set(
            x.astype(jnp.bfloat16))

    grid = (b_pad // tile_b,)

    def const(shape):
        # Weights/biases: same block every grid step -> DMA'd once, resident in VMEM.
        return pl.BlockSpec(shape, lambda i: (0, 0))

    flops = 2 * b_pad * (in_dim * h1_pad + h1_pad * h2_pad + h2_pad * out_dim)
    bytes_accessed = (
        int(x_in.size) * x_in.dtype.itemsize          # input stream
        + b_pad * out_dim * 4                         # f32 output stream (true width)
        + sum(int(v.size) * v.dtype.itemsize for v in packed.values())
    )

    out_p = pl.pallas_call(
        _mlp_kernel,
        out_shape=jax.ShapeDtypeStruct((b_pad, out_dim), jnp.float32),
        grid=grid,
        in_specs=[
            pl.BlockSpec((tile_b, in_dim), lambda i: (i, 0)),   # x: streamed per tile
            const((in_dim, h1_pad)),
            const((1, h1_pad)),
            const((h1_pad, h2_pad)),
            const((1, h2_pad)),
            const((h2_pad, out_dim)),
            const((1, out_dim)),
        ],
        out_specs=pl.BlockSpec((tile_b, out_dim), lambda i: (i, 0)),
        compiler_params=pltpu.CompilerParams(
            dimension_semantics=("parallel",),     # megacore / v7x 2-TC sharding
            vmem_limit_bytes=32 * 1024 * 1024,     # explicit; safe on 64 MiB v7x VMEM
        ),
        cost_estimate=pl.CostEstimate(
            flops=flops, transcendentals=0, bytes_accessed=bytes_accessed),
    )(x_in, packed["w1"], packed["b1"], packed["w2"], packed["b2"],
      packed["w3"], packed["b3"])

    return out_p if b_pad == B else out_p[:B]


# ---------------------------------------------------------------------------
# References.
# ---------------------------------------------------------------------------
def mlp_reference_f32(x, p):
    h1 = jnp.maximum(x @ p["w1"] + p["b1"], 0.0)
    h2 = jnp.maximum(h1 @ p["w2"] + p["b2"], 0.0)
    return h2 @ p["w3"] + p["b3"]


def mlp_reference_mixed(x, packed):
    """Mirrors the kernel's mixed precision (bf16 MXU operands, f32 accumulate)."""
    bf16 = jnp.bfloat16
    h1 = jnp.maximum(
        jnp.dot(x.astype(bf16), packed["w1"], preferred_element_type=jnp.float32)
        + packed["b1"], 0.0)
    h2 = jnp.maximum(
        jnp.dot(h1.astype(bf16), packed["w2"], preferred_element_type=jnp.float32)
        + packed["b2"], 0.0)
    return (jnp.dot(h2.astype(bf16), packed["w3"], preferred_element_type=jnp.float32)
            + packed["b3"])


if __name__ == "__main__":
    key = jax.random.PRNGKey(0)
    k_param, k_x1, k_x2 = jax.random.split(key, 3)

    input_num, output_num = 32, 10
    params = init_params(k_param, input_num, output_num)
    packed, meta = pack_params(params)

    # Case 1: tiny batch (exercises batch padding; grid=(2,) via even-grid rule).
    B1 = 8
    x1 = jax.random.normal(k_x1, (B1, input_num), jnp.float32)
    out1 = jax.block_until_ready(mlp_forward(x1, packed, meta))
    assert out1.shape == (B1, output_num)
    assert jnp.allclose(out1, mlp_reference_mixed(x1, packed), atol=1e-3, rtol=1e-3)
    assert jnp.allclose(out1, mlp_reference_f32(x1, params), atol=5e-2, rtol=5e-2)

    # Case 2: batch that tiles exactly (exercises the no-padding / in-kernel-cast path).
    B2 = 512
    x2 = jax.random.normal(k_x2, (B2, input_num), jnp.float32)
    out2 = jax.block_until_ready(mlp_forward(x2, packed, meta))
    assert out2.shape == (B2, output_num)
    assert jnp.allclose(out2, mlp_reference_mixed(x2, packed), atol=1e-3, rtol=1e-3)
    assert jnp.allclose(out2, mlp_reference_f32(x2, params), atol=5e-2, rtol=5e-2)

    print("KERNEL_OK")
</pallas_src>

<mosaic_0001>
module attributes {stable_mosaic.version = 11 : i64} {
  func.func @_mlp_kernel(%arg0: i32, %arg1: memref<8x32xbf16, #tpu.memory_space<vmem>>, %arg2: memref<32x128xbf16, #tpu.memory_space<vmem>>, %arg3: memref<1x128xf32, #tpu.memory_space<vmem>>, %arg4: memref<128x128xbf16, #tpu.memory_space<vmem>>, %arg5: memref<1x128xf32, #tpu.memory_space<vmem>>, %arg6: memref<128x10xbf16, #tpu.memory_space<vmem>>, %arg7: memref<1x10xf32, #tpu.memory_space<vmem>>, %arg8: memref<8x10xf32, #tpu.memory_space<vmem>>) attributes {dimension_semantics = [#tpu.dimension_semantics<parallel>], iteration_bounds = array<i64: 2>, scalar_prefetch = 0 : i64, scratch_operands = 0 : i64, tpu.core_type = #tpu.core_type<tc>, window_params = [{transform_indices = @transform_0, window_bounds = array<i64: 8, 32>}, {pipeline_mode = #tpu.pipeline_mode<synchronous>, transform_indices = @transform_1, window_bounds = array<i64: 32, 128>}, {pipeline_mode = #tpu.pipeline_mode<synchronous>, transform_indices = @transform_2, window_bounds = array<i64: 1, 128>}, {pipeline_mode = #tpu.pipeline_mode<synchronous>, transform_indices = @transform_3, window_bounds = array<i64: 128, 128>}, {pipeline_mode = #tpu.pipeline_mode<synchronous>, transform_indices = @transform_4, window_bounds = array<i64: 1, 128>}, {pipeline_mode = #tpu.pipeline_mode<synchronous>, transform_indices = @transform_5, window_bounds = array<i64: 128, 10>}, {pipeline_mode = #tpu.pipeline_mode<synchronous>, transform_indices = @transform_6, window_bounds = array<i64: 1, 10>}, {transform_indices = @transform_7, window_bounds = array<i64: 8, 10>}]} {
    %c0 = arith.constant 0 : index
    %c0_0 = arith.constant 0 : index
    %0 = vector.load %arg1[%c0, %c0_0] : memref<8x32xbf16, #tpu.memory_space<vmem>>, vector<8x32xbf16>
    %c0_1 = arith.constant 0 : index
    %c0_2 = arith.constant 0 : index
    %1 = vector.load %arg2[%c0_1, %c0_2] : memref<32x128xbf16, #tpu.memory_space<vmem>>, vector<32x128xbf16>
    %cst = arith.constant dense<0.000000e+00> : vector<8x128xf32>
    %2 = tpu.matmul %0, %1, %cst {dimension_numbers = #tpu.dot_dimension_numbers<[1], [0], [0], [1], [0, 0, 1, 1], [], []>} : vector<8x32xbf16>, vector<32x128xbf16>, vector<8x128xf32> -> vector<8x128xf32>
    %c0_3 = arith.constant 0 : index
    %c0_4 = arith.constant 0 : index
    %3 = vector.load %arg3[%c0_3, %c0_4] : memref<1x128xf32, #tpu.memory_space<vmem>>, vector<1x128xf32>
    %4 = vector.broadcast %3 : vector<1x128xf32> to vector<8x128xf32>
    %5 = arith.addf %2, %4 : vector<8x128xf32>
    %cst_5 = arith.constant 0.000000e+00 : f32
    %6 = vector.broadcast %cst_5 : f32 to vector<8x128xf32>
    %7 = arith.maximumf %5, %6 : vector<8x128xf32>
    %8 = arith.truncf %7 : vector<8x128xf32> to vector<8x128xbf16>
    %c0_6 = arith.constant 0 : index
    %c0_7 = arith.constant 0 : index
    %9 = vector.load %arg4[%c0_6, %c0_7] : memref<128x128xbf16, #tpu.memory_space<vmem>>, vector<128x128xbf16>
    %cst_8 = arith.constant dense<0.000000e+00> : vector<8x128xf32>
    %10 = tpu.matmul %8, %9, %cst_8 {dimension_numbers = #tpu.dot_dimension_numbers<[1], [0], [0], [1], [0, 0, 1, 1], [], []>} : vector<8x128xbf16>, vector<128x128xbf16>, vector<8x128xf32> -> vector<8x128xf32>
    %c0_9 = arith.constant 0 : index
    %c0_10 = arith.constant 0 : index
    %11 = vector.load %arg5[%c0_9, %c0_10] : memref<1x128xf32, #tpu.memory_space<vmem>>, vector<1x128xf32>
    %12 = vector.broadcast %11 : vector<1x128xf32> to vector<8x128xf32>
    %13 = arith.addf %10, %12 : vector<8x128xf32>
    %cst_11 = arith.constant 0.000000e+00 : f32
    %14 = vector.broadcast %cst_11 : f32 to vector<8x128xf32>
    %15 = arith.maximumf %13, %14 : vector<8x128xf32>
    %16 = arith.truncf %15 : vector<8x128xf32> to vector<8x128xbf16>
    %c0_12 = arith.constant 0 : index
    %c0_13 = arith.constant 0 : index
    %17 = vector.load %arg6[%c0_12, %c0_13] : memref<128x10xbf16, #tpu.memory_space<vmem>>, vector<128x10xbf16>
    %cst_14 = arith.constant dense<0.000000e+00> : vector<8x10xf32>
    %18 = tpu.matmul %16, %17, %cst_14 {dimension_numbers = #tpu.dot_dimension_numbers<[1], [0], [0], [1], [0, 0, 1, 1], [], []>} : vector<8x128xbf16>, vector<128x10xbf16>, vector<8x10xf32> -> vector<8x10xf32>
    %c0_15 = arith.constant 0 : index
    %c0_16 = arith.constant 0 : index
    %19 = vector.load %arg7[%c0_15, %c0_16] : memref<1x10xf32, #tpu.memory_space<vmem>>, vector<1x10xf32>
    %20 = vector.broadcast %19 : vector<1x10xf32> to vector<8x10xf32>
    %21 = arith.addf %18, %20 : vector<8x10xf32>
    %c0_17 = arith.constant 0 : index
    %c0_18 = arith.constant 0 : index
    %22 = vector.load %arg8[%c0_17, %c0_18] : memref<8x10xf32, #tpu.memory_space<vmem>>, vector<8x10xf32>
    tpu.vector_store %arg8[%c0_17, %c0_18], %21 {strides = array<i32>} : memref<8x10xf32, #tpu.memory_space<vmem>>, vector<8x10xf32>,
    return
  }
  func.func @transform_0(%arg0: i32) -> (i32, i32) {
    %c0_i32 = arith.constant 0 : i32
    %c0_i32_0 = arith.constant 0 : i32
    return %arg0, %c0_i32 : i32, i32
  }
  func.func @transform_1(%arg0: i32) -> (i32, i32) {
    %c0_i32 = arith.constant 0 : i32
    %c0_i32_0 = arith.constant 0 : i32
    %c0_i32_1 = arith.constant 0 : i32
    return %c0_i32, %c0_i32_0 : i32, i32
  }
  func.func @transform_2(%arg0: i32) -> (i32, i32) {
    %c0_i32 = arith.constant 0 : i32
    %c0_i32_0 = arith.constant 0 : i32
    %c0_i32_1 = arith.constant 0 : i32
    return %c0_i32, %c0_i32_0 : i32, i32
  }
  func.func @transform_3(%arg0: i32) -> (i32, i32) {
    %c0_i32 = arith.constant 0 : i32
    %c0_i32_0 = arith.constant 0 : i32
    %c0_i32_1 = arith.constant 0 : i32
    return %c0_i32, %c0_i32_0 : i32, i32
  }
  func.func @transform_4(%arg0: i32) -> (i32, i32) {
    %c0_i32 = arith.constant 0 : i32
    %c0_i32_0 = arith.constant 0 : i32
    %c0_i32_1 = arith.constant 0 : i32
    return %c0_i32, %c0_i32_0 : i32, i32
  }
  func.func @transform_5(%arg0: i32) -> (i32, i32) {
    %c0_i32 = arith.constant 0 : i32
    %c0_i32_0 = arith.constant 0 : i32
    %c0_i32_1 = arith.constant 0 : i32
    return %c0_i32, %c0_i32_0 : i32, i32
  }
  func.func @transform_6(%arg0: i32) -> (i32, i32) {
    %c0_i32 = arith.constant 0 : i32
    %c0_i32_0 = arith.constant 0 : i32
    %c0_i32_1 = arith.constant 0 : i32
    return %c0_i32, %c0_i32_0 : i32, i32
  }
  func.func @transform_7(%arg0: i32) -> (i32, i32) {
    %c0_i32 = arith.constant 0 : i32
    %c0_i32_0 = arith.constant 0 : i32
    return %arg0, %c0_i32 : i32, i32
  }
}

</mosaic_0001>

<llo_original>
// kernel: tpu_custom_call.1
$region0: #{tpu_custom_call.1}
  #allocation0 [shape = 'u32[]', space=smem, size = 0x4, offset = 0x4, fixed_abs, tag = 'smem constant byte address 0x4 - core index']
  #allocation1 [shape = 'u32[144,128]{1,0:T(1,128)}', space=vmem, size = 0x12000, scoped, tag = 'internal scratch']
  %s0 = inlined_call_operand.hbm [shape: bf16[16,32], index: 0, kind: input, shape index: {}]
  %s1 = inlined_call_operand.vmem [shape: bf16[32,128], index: 1, kind: input, shape index: {}]
  %s2 = inlined_call_operand.vmem [shape: f32[1,128], index: 2, kind: input, shape index: {}]
  %s3 = inlined_call_operand.vmem [shape: bf16[128,128], index: 3, kind: input, shape index: {}]
  %s4 = inlined_call_operand.vmem [shape: f32[1,128], index: 4, kind: input, shape index: {}]
  %s5 = inlined_call_operand.vmem [shape: bf16[128,10], index: 5, kind: input, shape index: {}]
  %s6 = inlined_call_operand.vmem [shape: f32[1,10], index: 6, kind: input, shape index: {}]
  %s7 = inlined_call_operand.hbm [shape: f32[16,10], index: 7, kind: output, shape index: {}]
  %s8 = sld [smem:[#allocation0]]
  $region65: #{tpu_custom_call.1} parent=0
    _
  %s10 = ssub.s32 1, %s8
  %s11 = scalar_select 0, %s10, %s8
  $region1: #{tpu_custom_call.1} parent=0
    #allocation2 [shape = 'u8[4096]{0}', space=vmem, size = 0x1000, scoped, tag = 'input window, operand 0']
    #allocation3 [shape = 's32[2]{0}', space=sflag, size = 0x8, scoped, tag = 'scoped memory for tpu_custom_call.1']
    #allocation4 [shape = 's32[2]{0}', space=sflag, size = 0x8, scoped, tag = 'scoped memory for tpu_custom_call.1']
    #allocation5 [shape = 'u8[8192]{0}', space=vmem, size = 0x2000, scoped, tag = 'output window, operand 0']
    %12 = vsyncpa [#allocation3], 0
    %s13 = scalar_lea.sflag [#allocation3], 1
    %14 = vsyncpa %s13, 0
    %15 = vsyncpa [#allocation4], 0
    %s16 = scalar_lea.sflag [#allocation4], 1
    %17 = vsyncpa %s16, 0
    loop: start=0, step=1, limit=4
    $region2: #{tpu_custom_call.1} parent=1 // loop_pre_header
      _
    $region3: #{tpu_custom_call.1} parent=1 // loop_header
      %s19 = sphi 0, %s23
      %p20 = scmp.ge.s32.totalorder %s19, 4
      %s29 = sphi 0, %s31
      %s32 = sphi 0, %s29
      %s33 = sphi 0, %s32
      %s49 = sphi 0, %s33
      %s53 = sphi 0, %s53
      %s55 = sphi 0, %s53
      %s56 = sphi 0, %s55
      %s70 = sphi 0, %s56
      %s74 = sphi 0, %s74
      %s76 = sphi 0, %s74
      %s77 = sphi 0, %s76
      %s91 = sphi 0, %s77
      %s95 = sphi 0, %s95
      %s97 = sphi 0, %s95
      %s98 = sphi 0, %s97
      %s112 = sphi 0, %s98
      %s116 = sphi 0, %s116
      %s118 = sphi 0, %s116
      %s119 = sphi 0, %s118
      %s133 = sphi 0, %s119
      %s137 = sphi 0, %s137
      %s139 = sphi 0, %s137
      %s140 = sphi 0, %s139
      %s154 = sphi 0, %s140
      %s158 = sphi 0, %s158
      %s160 = sphi 0, %s158
      %s161 = sphi 0, %s160
      %s175 = sphi 0, %s161
      %s181 = sphi 0, %s183
      %s184 = sphi 0, %s181
      %s185 = sphi 0, %s184
      %s201 = sphi 0, %s185
    $region4: #{tpu_custom_call.1} parent=1 // loop_header_branch
      %22 = sbr.rel (%p20) target = $region8
    $region5: #{tpu_custom_call.1} parent=1 // loop_body
      %s24 = ssub.s32 %s19, 1
      %s25 = ssub.s32 %s19, 2
      %s26 = sadd.s32 %s19, 1
      %s27 = ssub.s32 %s19, %s26
      %p28 = scmp.eq.s32.totalorder %s27, 0
      %s30 = sadd.s32 %s29, 1
      %s31 = scalar_select %p28, %s29, %s30
      %p34 = pneg %p28
      %p35 = scmp.eq.s32.totalorder %s19, 1
      %p36 = por %p34, %p35
      %p37 = scmp.ne.s32.totalorder %s29, %s32
      %p38 = scmp.eq.s32.totalorder %s19, 0
      %p39 = por %p37, %p38
      %p40 = scmp.ne.s32.totalorder %s29, %s32
      %p41 = scmp.eq.s32.totalorder %s24, 1
      %p42 = por %p40, %p41
      %p43 = scmp.ne.s32.totalorder %s32, %s33
      %p44 = scmp.eq.s32.totalorder %s24, 0
      %p45 = por %p43, %p44
      %p46 = scmp.ne.s32.totalorder %s32, %s33
      %p47 = scmp.eq.s32.totalorder %s25, 1
      %p48 = por %p46, %p47
      %p50 = scmp.ne.s32.totalorder %s33, %s49
      %p51 = scmp.eq.s32.totalorder %s25, 0
      %p52 = por %p50, %p51
      %s54 = sadd.s32 %s53, 1
      %p57 = scmp.eq.s32.totalorder %s19, 1
      %p58 = scmp.ne.s32.totalorder %s53, %s55
      %p59 = scmp.eq.s32.totalorder %s19, 0
      %p60 = por %p58, %p59
      %p61 = scmp.ne.s32.totalorder %s53, %s55
      %p62 = scmp.eq.s32.totalorder %s24, 1
      %p63 = por %p61, %p62
      %p64 = scmp.ne.s32.totalorder %s55, %s56
      %p65 = scmp.eq.s32.totalorder %s24, 0
      %p66 = por %p64, %p65
      %p67 = scmp.ne.s32.totalorder %s55, %s56
      %p68 = scmp.eq.s32.totalorder %s25, 1
      %p69 = por %p67, %p68
      %p71 = scmp.ne.s32.totalorder %s56, %s70
      %p72 = scmp.eq.s32.totalorder %s25, 0
      %p73 = por %p71, %p72
      %s75 = sadd.s32 %s74, 1
      %p78 = scmp.eq.s32.totalorder %s19, 1
      %p79 = scmp.ne.s32.totalorder %s74, %s76
      %p80 = scmp.eq.s32.totalorder %s19, 0
      %p81 = por %p79, %p80
      %p82 = scmp.ne.s32.totalorder %s74, %s76
      %p83 = scmp.eq.s32.totalorder %s24, 1
      %p84 = por %p82, %p83
      %p85 = scmp.ne.s32.totalorder %s76, %s77
      %p86 = scmp.eq.s32.totalorder %s24, 0
      %p87 = por %p85, %p86
      %p88 = scmp.ne.s32.totalorder %s76, %s77
      %p89 = scmp.eq.s32.totalorder %s25, 1
      %p90 = por %p88, %p89
      %p92 = scmp.ne.s32.totalorder %s77, %s91
      %p93 = scmp.eq.s32.totalorder %s25, 0
      %p94 = por %p92, %p93
      %s96 = sadd.s32 %s95, 1
      %p99 = scmp.eq.s32.totalorder %s19, 1
      %p100 = scmp.ne.s32.totalorder %s95, %s97
      %p101 = scmp.eq.s32.totalorder %s19, 0
      %p102 = por %p100, %p101
      %p103 = scmp.ne.s32.totalorder %s95, %s97
      %p104 = scmp.eq.s32.totalorder %s24, 1
      %p105 = por %p103, %p104
      %p106 = scmp.ne.s32.totalorder %s97, %s98
      %p107 = scmp.eq.s32.totalorder %s24, 0
      %p108 = por %p106, %p107
      %p109 = scmp.ne.s32.totalorder %s97, %s98
      %p110 = scmp.eq.s32.totalorder %s25, 1
      %p111 = por %p109, %p110
      %p113 = scmp.ne.s32.totalorder %s98, %s112
      %p114 = scmp.eq.s32.totalorder %s25, 0
      %p115 = por %p113, %p114
      %s117 = sadd.s32 %s116, 1
      %p120 = scmp.eq.s32.totalorder %s19, 1
      %p121 = scmp.ne.s32.totalorder %s116, %s118
      %p122 = scmp.eq.s32.totalorder %s19, 0
      %p123 = por %p121, %p122
      %p124 = scmp.ne.s32.totalorder %s116, %s118
      %p125 = scmp.eq.s32.totalorder %s24, 1
      %p126 = por %p124, %p125
      %p127 = scmp.ne.s32.totalorder %s118, %s119
      %p128 = scmp.eq.s32.totalorder %s24, 0
      %p129 = por %p127, %p128
      %p130 = scmp.ne.s32.totalorder %s118, %s119
      %p131 = scmp.eq.s32.totalorder %s25, 1
      %p132 = por %p130, %p131
      %p134 = scmp.ne.s32.totalorder %s119, %s133
      %p135 = scmp.eq.s32.totalorder %s25, 0
      %p136 = por %p134, %p135
      %s138 = sadd.s32 %s137, 1
      %p141 = scmp.eq.s32.totalorder %s19, 1
      %p142 = scmp.ne.s32.totalorder %s137, %s139
      %p143 = scmp.eq.s32.totalorder %s19, 0
      %p144 = por %p142, %p143
      %p145 = scmp.ne.s32.totalorder %s137, %s139
      %p146 = scmp.eq.s32.totalorder %s24, 1
      %p147 = por %p145, %p146
      %p148 = scmp.ne.s32.totalorder %s139, %s140
      %p149 = scmp.eq.s32.totalorder %s24, 0
      %p150 = por %p148, %p149
      %p151 = scmp.ne.s32.totalorder %s139, %s140
      %p152 = scmp.eq.s32.totalorder %s25, 1
      %p153 = por %p151, %p152
      %p155 = scmp.ne.s32.totalorder %s140, %s154
      %p156 = scmp.eq.s32.totalorder %s25, 0
      %p157 = por %p155, %p156
      %s159 = sadd.s32 %s158, 1
      %p162 = scmp.eq.s32.totalorder %s19, 1
      %p163 = scmp.ne.s32.totalorder %s158, %s160
      %p164 = scmp.eq.s32.totalorder %s19, 0
      %p165 = por %p163, %p164
      %p166 = scmp.ne.s32.totalorder %s158, %s160
      %p167 = scmp.eq.s32.totalorder %s24, 1
      %p168 = por %p166, %p167
      %p169 = scmp.ne.s32.totalorder %s160, %s161
      %p170 = scmp.eq.s32.totalorder %s24, 0
      %p171 = por %p169, %p170
      %p172 = scmp.ne.s32.totalorder %s160, %s161
      %p173 = scmp.eq.s32.totalorder %s25, 1
      %p174 = por %p172, %p173
      %p176 = scmp.ne.s32.totalorder %s161, %s175
      %p177 = scmp.eq.s32.totalorder %s25, 0
      %p178 = por %p176, %p177
      %s179 = ssub.s32 %s19, %s26
      %p180 = scmp.eq.s32.totalorder %s179, 0
      %s182 = sadd.s32 %s181, 1
      %s183 = scalar_select %p180, %s181, %s182
      %p186 = pneg %p180
      %p187 = scmp.eq.s32.totalorder %s19, 1
      %p188 = por %p186, %p187
      %p189 = scmp.ne.s32.totalorder %s181, %s184
      %p190 = scmp.eq.s32.totalorder %s19, 0
      %p191 = por %p189, %p190
      %p192 = scmp.ne.s32.totalorder %s181, %s184
      %p193 = scmp.eq.s32.totalorder %s24, 1
      %p194 = por %p192, %p193
      %p195 = scmp.ne.s32.totalorder %s184, %s185
      %p196 = scmp.eq.s32.totalorder %s24, 0
      %p197 = por %p195, %p196
      %p198 = scmp.ne.s32.totalorder %s184, %s185
      %p199 = scmp.eq.s32.totalorder %s25, 1
      %p200 = por %p198, %p199
      %p202 = scmp.ne.s32.totalorder %s185, %s201
      %p203 = scmp.eq.s32.totalorder %s25, 0
      %p204 = por %p202, %p203
      %p205 = scmp.le.s32.totalorder 1, %s19
      %p206 = scmp.lt.s32.totalorder %s19, 3
      %p207 = pnand %p205, %p206
      %p208 = pneg %p207
      // Predicated region
      $region9: #{tpu_custom_call.1} parent=5 // pred_check
        _
      $region10: #{tpu_custom_call.1} parent=5 // pred_check_branch
        %210 = sbr.rel (%p207) target = $region12
      $region11: #{tpu_custom_call.1} parent=5 // pred_region
        %s211 = ssub.s32 %s19, 1
        // Predicated region
        $region13: #{tpu_custom_call.1} parent=11 // pred_check
          %p212 = pneg %p66
        $region14: #{tpu_custom_call.1} parent=11 // pred_check_branch
          %214 = sbr.rel (%p212) target = $region16
        $region15: #{tpu_custom_call.1} parent=11 // pred_region
          _
        $region16: #{tpu_custom_call.1} parent=11 // pred_fallthru
          _
        // Predicated region
        $region17: #{tpu_custom_call.1} parent=11 // pred_check
          %p215 = pneg %p87
        $region18: #{tpu_custom_call.1} parent=11 // pred_check_branch
          %217 = sbr.rel (%p215) target = $region20
        $region19: #{tpu_custom_call.1} parent=11 // pred_region
          _
        $region20: #{tpu_custom_call.1} parent=11 // pred_fallthru
          _
        // Predicated region
        $region21: #{tpu_custom_call.1} parent=11 // pred_check
          %p218 = pneg %p108
        $region22: #{tpu_custom_call.1} parent=11 // pred_check_branch
          %220 = sbr.rel (%p218) target = $region24
        $region23: #{tpu_custom_call.1} parent=11 // pred_region
          _
        $region24: #{tpu_custom_call.1} parent=11 // pred_fallthru
          _
        // Predicated region
        $region25: #{tpu_custom_call.1} parent=11 // pred_check
          %p221 = pneg %p129
        $region26: #{tpu_custom_call.1} parent=11 // pred_check_branch
          %223 = sbr.rel (%p221) target = $region28
        $region27: #{tpu_custom_call.1} parent=11 // pred_region
          _
        $region28: #{tpu_custom_call.1} parent=11 // pred_fallthru
          _
        // Predicated region
        $region29: #{tpu_custom_call.1} parent=11 // pred_check
          %p224 = pneg %p150
        $region30: #{tpu_custom_call.1} parent=11 // pred_check_branch
          %226 = sbr.rel (%p224) target = $region32
        $region31: #{tpu_custom_call.1} parent=11 // pred_region
          _
        $region32: #{tpu_custom_call.1} parent=11 // pred_fallthru
          _
        // Predicated region
        $region33: #{tpu_custom_call.1} parent=11 // pred_check
          %p227 = pneg %p171
        $region34: #{tpu_custom_call.1} parent=11 // pred_check_branch
          %229 = sbr.rel (%p227) target = $region36
        $region35: #{tpu_custom_call.1} parent=11 // pred_region
          _
        $region36: #{tpu_custom_call.1} parent=11 // pred_fallthru
          _
      $region12: #{tpu_custom_call.1} parent=5 // pred_fallthru
        _
      %p230 = scmp.lt.s32.totalorder %s19, 2
      // Predicated region
      $region37: #{tpu_custom_call.1} parent=5 // pred_check
        %p231 = pneg %p230
      $region38: #{tpu_custom_call.1} parent=5 // pred_check_branch
        %233 = sbr.rel (%p231) target = $region40
      $region39: #{tpu_custom_call.1} parent=5 // pred_region
        // Predicated region
        $region41: #{tpu_custom_call.1} parent=39 // pred_check
          %p234 = pneg %p39
        $region42: #{tpu_custom_call.1} parent=39 // pred_check_branch
          %236 = sbr.rel (%p234) target = $region44
        $region43: #{tpu_custom_call.1} parent=39 // pred_region
          %s237 = sand.u32 %s29, 1
          %s238 = scalar_lea.sflag [#allocation3], %s237
          %s239 = sand.u32 %s29, 1
          %s240 = smul.addr %s239, 4
          %s241 = scalar_lea.vmem [#allocation2], %s240
          %s243 = ssub.s32 64, 64
          %244 = vsyncadd %s238, %s243
          %s245 = smul.addr %s19, 64
          %s246 = scalar_lea.hbm %s0, %s245
          %s248 = sshll.u32 %s241, 4
          %s249 = int_to_ptr.vmem [resolvable:$true] %s248
          %251 = dma.hbm_to_vmem [thread:$0]  %s246, 64, %s249, %s238
        $region44: #{tpu_custom_call.1} parent=39 // pred_fallthru
          _
      $region40: #{tpu_custom_call.1} parent=5 // pred_fallthru
        _
      %p252 = scmp.le.s32.totalorder 1, %s19
      %p253 = scmp.lt.s32.totalorder %s19, 3
      %p254 = pnand %p252, %p253
      %p255 = pneg %p254
      // Predicated region
      $region45: #{tpu_custom_call.1} parent=5 // pred_check
        _
      $region46: #{tpu_custom_call.1} parent=5 // pred_check_branch
        %257 = sbr.rel (%p254) target = $region48
      $region47: #{tpu_custom_call.1} parent=5 // pred_region
        %s258 = ssub.s32 %s19, 1
        %s259 = sand.u32 %s32, 1
        %s260 = scalar_lea.sflag [#allocation3], %s259
        %s261 = sand.u32 %s32, 1
        %s262 = smul.addr %s261, 4
        %s263 = scalar_lea.vmem [#allocation2], %s262
        // Predicated region
        $region49: #{tpu_custom_call.1} parent=47 // pred_check
          %p264 = pneg %p45
        $region50: #{tpu_custom_call.1} parent=47 // pred_check_branch
          %266 = sbr.rel (%p264) target = $region52
        $region51: #{tpu_custom_call.1} parent=47 // pred_region
          %267 = dma.done %s260, 64
        $region52: #{tpu_custom_call.1} parent=47 // pred_fallthru
          _
        %s268 = sand.u32 %s32, 1
        %s269 = scalar_lea.sflag [#allocation3], %s268
        %s270 = sand.u32 %s32, 1
        %s271 = smul.addr %s270, 4
        %s272 = scalar_lea.vmem [#allocation2], %s271
        %p273 = pneg %p45
        %p274 = pneg %p42
        %p275 = pneg %p66
        %p276 = pneg %p63
        %p277 = pneg %p87
        %p278 = pneg %p84
        %p279 = pneg %p108
        %p280 = pneg %p105
        %p281 = pneg %p129
        %p282 = pneg %p126
        %p283 = pneg %p150
        %p284 = pneg %p147
        %p285 = pneg %p171
        %p286 = pneg %p168
        %p287 = pneg %p197
        %p288 = pneg %p194
        %s289 = sand.u32 %s184, 1
        %s290 = scalar_lea.sflag [#allocation4], %s289
        %s291 = sand.u32 %s184, 1
        %s292 = smul.addr %s291, 8
        %s293 = scalar_lea.vmem [#allocation5], %s292
        %v295 = vld [vmem:[%s263] sm:$0xf]
        %v296 = vld [vmem:[%s1] sm:$0xf]
        %v297 = vld [vmem:[%s1 + $0x4] sm:$0xf]
        %v298 = vld [vmem:[%s1 + $0x8] sm:$0xf]
        %v299 = vld [vmem:[%s1 + $0xc] sm:$0xf]
        %v300 = vld [vmem:[%s2] sm:$0x1]
        %v302 = vlaneseq
        %v303 = vshrl.u32 %v302, 7
        %v304 = vsub.s32 0, %v303
        %v305 = vrot.slane %v300, %v304
        %v311 = vunpack.c.l.b16 %v296
        %v312 = vunpack.c.l.b16 %v297
        %v313 = vunpack.c.l.b16 %v298
        %v314 = vunpack.c.l.b16 %v299
        %v315 = vpack.c.b16 %v312, %v311
        %v316 = vpack.c.b16 %v314, %v313
        %vm319 = vcmask 261120
        %v321 = vsel %vm319, %v295, 0
        %323 = vmatprep.subr.bf16.mxu0 0
        %324 = vmatpush1.bf16.msra.mxu0 %v315
        %325 = vmatprep.subr.bf16.mxu0 0
        %326 = vmatpush1.bf16.msra.mxu0 %v316
        %327 = vmatprep.subr.bf16.mxu0 0
        %328 = vmatpush1.bf16.msra.mxu0 0
        %329 = vmatprep.subr.bf16.mxu0 0
        %330 = vmatpush1.bf16.msra.mxu0 0
        %331 = vmatprep.subr.bf16.mxu0 0
        %332 = vmatpush1.bf16.msra.mxu0 0
        %333 = vmatprep.subr.bf16.mxu0 0
        %334 = vmatpush1.bf16.msra.mxu0 0
        %335 = vmatprep.subr.bf16.mxu0 0
        %336 = vmatpush1.bf16.msra.mxu0 0
        %337 = vmatprep.subr.bf16.mxu0 0
        %338 = vmatpush1.bf16.msra.mxu0 0
        %339 = vmatprep.subr.bf16.mxu0 0
        %340 = vmatpush1.bf16.msra.mxu0 0
        %341 = vmatprep.subr.bf16.mxu0 0
        %342 = vmatpush1.bf16.msra.mxu0 0
        %343 = vmatprep.subr.bf16.mxu0 0
        %344 = vmatpush1.bf16.msra.mxu0 0
        %345 = vmatprep.subr.bf16.mxu0 0
        %346 = vmatpush1.bf16.msra.mxu0 0
        %347 = vmatprep.subr.bf16.mxu0 0
        %348 = vmatpush1.bf16.msra.mxu0 0
        %349 = vmatprep.subr.bf16.mxu0 0
        %350 = vmatpush1.bf16.msra.mxu0 0
        %351 = vmatprep.subr.bf16.mxu0 0
        %352 = vmatpush1.bf16.msra.mxu0 0
        %353 = vmatprep.subr.bf16.mxu0 0
        %354 = vmatpush1.bf16.msra.mxu0 0
        %355 = vmatprep.mubr.bf16.mxu0 0
        %356 = vmatmul.mubr.bf16.gmra.mrb[0].mxu0 %v321
        %v357 = vpop.f32.mrb[0].mxu0
        %v358 = vadd.f32 %v305, %v357
        %v359 = vpop.f32.mrb[0].mxu0
        %v360 = vpop.f32.mrb[0].mxu0
        %v361 = vpop.f32.mrb[0].mxu0
        %362 = vdwg.mxu0
        %v363 = vmax.f32 %v358, 0.0
        %v364 = vpack.c.bf16 %v363, %v363
        %v365 = vld [vmem:[%s3] sm:$0xf]
        %v366 = vld [vmem:[%s3 + $0x4] sm:$0xf]
        %v367 = vld [vmem:[%s3 + $0x8] sm:$0xf]
        %v368 = vld [vmem:[%s3 + $0xc] sm:$0xf]
        %v369 = vld [vmem:[%s3 + $0x10] sm:$0xf]
        %v370 = vld [vmem:[%s3 + $0x14] sm:$0xf]
        %v371 = vld [vmem:[%s3 + $0x18] sm:$0xf]
        %v372 = vld [vmem:[%s3 + $0x1c] sm:$0xf]
        %v373 = vld [vmem:[%s3 + $0x20] sm:$0xf]
        %v374 = vld [vmem:[%s3 + $0x24] sm:$0xf]
        %v375 = vld [vmem:[%s3 + $0x28] sm:$0xf]
        %v376 = vld [vmem:[%s3 + $0x2c] sm:$0xf]
        %v377 = vld [vmem:[%s3 + $0x30] sm:$0xf]
        %v378 = vld [vmem:[%s3 + $0x34] sm:$0xf]
        %v379 = vld [vmem:[%s3 + $0x38] sm:$0xf]
        %v380 = vld [vmem:[%s3 + $0x3c] sm:$0xf]
        %v381 = vld [vmem:[%s4] sm:$0x1]
        %v383 = vlaneseq
        %v384 = vshrl.u32 %v383, 7
        %v385 = vsub.s32 0, %v384
        %v386 = vrot.slane %v381, %v385
        %v404 = vunpack.c.l.b16 %v365
        %v405 = vunpack.c.l.b16 %v366
        %v406 = vunpack.c.l.b16 %v367
        %v407 = vunpack.c.l.b16 %v368
        %v408 = vunpack.c.l.b16 %v369
        %v409 = vunpack.c.l.b16 %v370
        %v410 = vunpack.c.l.b16 %v371
        %v411 = vunpack.c.l.b16 %v372
        %v412 = vunpack.c.l.b16 %v373
        %v413 = vunpack.c.l.b16 %v374
        %v414 = vunpack.c.l.b16 %v375
        %v415 = vunpack.c.l.b16 %v376
        %v416 = vunpack.c.l.b16 %v377
        %v417 = vunpack.c.l.b16 %v378
        %v418 = vunpack.c.l.b16 %v379
        %v419 = vunpack.c.l.b16 %v380
        %v420 = vpack.c.b16 %v405, %v404
        %v421 = vpack.c.b16 %v407, %v406
        %v422 = vpack.c.b16 %v409, %v408
        %v423 = vpack.c.b16 %v411, %v410
        %v424 = vpack.c.b16 %v413, %v412
        %v425 = vpack.c.b16 %v415, %v414
        %v426 = vpack.c.b16 %v417, %v416
        %v427 = vpack.c.b16 %v419, %v418
        %436 = vmatprep.subr.bf16.mxu0 0
        %437 = vmatpush1.bf16.msra.mxu0 %v420
        %438 = vmatprep.subr.bf16.mxu0 0
        %439 = vmatpush1.bf16.msra.mxu0 %v421
        %440 = vmatprep.subr.bf16.mxu0 0
        %441 = vmatpush1.bf16.msra.mxu0 %v422
        %442 = vmatprep.subr.bf16.mxu0 0
        %443 = vmatpush1.bf16.msra.mxu0 %v423
        %444 = vmatprep.subr.bf16.mxu0 0
        %445 = vmatpush1.bf16.msra.mxu0 %v424
        %446 = vmatprep.subr.bf16.mxu0 0
        %447 = vmatpush1.bf16.msra.mxu0 %v425
        %448 = vmatprep.subr.bf16.mxu0 0
        %449 = vmatpush1.bf16.msra.mxu0 %v426
        %450 = vmatprep.subr.bf16.mxu0 0
        %451 = vmatpush1.bf16.msra.mxu0 %v427
        %452 = vmatprep.subr.bf16.mxu0 0
        %453 = vmatpush1.bf16.msra.mxu0 0
        %454 = vmatprep.subr.bf16.mxu0 0
        %455 = vmatpush1.bf16.msra.mxu0 0
        %456 = vmatprep.subr.bf16.mxu0 0
        %457 = vmatpush1.bf16.msra.mxu0 0
        %458 = vmatprep.subr.bf16.mxu0 0
        %459 = vmatpush1.bf16.msra.mxu0 0
        %460 = vmatprep.subr.bf16.mxu0 0
        %461 = vmatpush1.bf16.msra.mxu0 0
        %462 = vmatprep.subr.bf16.mxu0 0
        %463 = vmatpush1.bf16.msra.mxu0 0
        %464 = vmatprep.subr.bf16.mxu0 0
        %465 = vmatpush1.bf16.msra.mxu0 0
        %466 = vmatprep.subr.bf16.mxu0 0
        %467 = vmatpush1.bf16.msra.mxu0 0
        %468 = vmatprep.mubr.bf16.mxu0 0
        %469 = vmatmul.mubr.bf16.gmra.mrb[0].mxu0 %v364
        %v470 = vpop.f32.mrb[0].mxu0
        %v471 = vadd.f32 %v386, %v470
        %v472 = vpop.f32.mrb[0].mxu0
        %v473 = vpop.f32.mrb[0].mxu0
        %v474 = vpop.f32.mrb[0].mxu0
        %475 = vdwg.mxu0
        %v476 = vmax.f32 %v471, 0.0
        %v477 = vpack.c.bf16 %v476, %v476
        %v478 = vld [vmem:[%s5] sm:$0xf]
        %v479 = vld [vmem:[%s5 + $0x4] sm:$0xf]
        %v480 = vld [vmem:[%s5 + $0x8] sm:$0xf]
        %v481 = vld [vmem:[%s5 + $0xc] sm:$0xf]
        %v482 = vld [vmem:[%s5 + $0x10] sm:$0xf]
        %v483 = vld [vmem:[%s5 + $0x14] sm:$0xf]
        %v484 = vld [vmem:[%s5 + $0x18] sm:$0xf]
        %v485 = vld [vmem:[%s5 + $0x1c] sm:$0xf]
        %v486 = vld [vmem:[%s5 + $0x20] sm:$0xf]
        %v487 = vld [vmem:[%s5 + $0x24] sm:$0xf]
        %v488 = vld [vmem:[%s5 + $0x28] sm:$0xf]
        %v489 = vld [vmem:[%s5 + $0x2c] sm:$0xf]
        %v490 = vld [vmem:[%s5 + $0x30] sm:$0xf]
        %v491 = vld [vmem:[%s5 + $0x34] sm:$0xf]
        %v492 = vld [vmem:[%s5 + $0x38] sm:$0xf]
        %v493 = vld [vmem:[%s5 + $0x3c] sm:$0xf]
        %v494 = vld [vmem:[%s6] sm:$0x1]
        %v496 = vlaneseq
        %v497 = vshrl.u32 %v496, 7
        %v498 = vsub.s32 0, %v497
        %v499 = vrot.slane %v494, %v498
        %v517 = vunpack.c.l.b16 %v478
        %v518 = vunpack.c.l.b16 %v479
        %v519 = vunpack.c.l.b16 %v480
        %v520 = vunpack.c.l.b16 %v481
        %v521 = vunpack.c.l.b16 %v482
        %v522 = vunpack.c.l.b16 %v483
        %v523 = vunpack.c.l.b16 %v484
        %v524 = vunpack.c.l.b16 %v485
        %v525 = vunpack.c.l.b16 %v486
        %v526 = vunpack.c.l.b16 %v487
        %v527 = vunpack.c.l.b16 %v488
        %v528 = vunpack.c.l.b16 %v489
        %v529 = vunpack.c.l.b16 %v490
        %v530 = vunpack.c.l.b16 %v491
        %v531 = vunpack.c.l.b16 %v492
        %v532 = vunpack.c.l.b16 %v493
        %v533 = vpack.c.b16 %v518, %v517
        %v534 = vpack.c.b16 %v520, %v519
        %v535 = vpack.c.b16 %v522, %v521
        %v536 = vpack.c.b16 %v524, %v523
        %v537 = vpack.c.b16 %v526, %v525
        %v538 = vpack.c.b16 %v528, %v527
        %v539 = vpack.c.b16 %v530, %v529
        %v540 = vpack.c.b16 %v532, %v531
        %549 = vmatprep.subr.bf16.mxu0 0
        %550 = vmatpush1.bf16.msra.mxu0 %v533
        %551 = vmatprep.subr.bf16.mxu0 0
        %552 = vmatpush1.bf16.msra.mxu0 %v534
        %553 = vmatprep.subr.bf16.mxu0 0
        %554 = vmatpush1.bf16.msra.mxu0 %v535
        %555 = vmatprep.subr.bf16.mxu0 0
        %556 = vmatpush1.bf16.msra.mxu0 %v536
        %557 = vmatprep.subr.bf16.mxu0 0
        %558 = vmatpush1.bf16.msra.mxu0 %v537
        %559 = vmatprep.subr.bf16.mxu0 0
        %560 = vmatpush1.bf16.msra.mxu0 %v538
        %561 = vmatprep.subr.bf16.mxu0 0
        %562 = vmatpush1.bf16.msra.mxu0 %v539
        %563 = vmatprep.subr.bf16.mxu0 0
        %564 = vmatpush1.bf16.msra.mxu0 %v540
        %565 = vmatprep.subr.bf16.mxu0 0
        %566 = vmatpush1.bf16.msra.mxu0 0
        %567 = vmatprep.subr.bf16.mxu0 0
        %568 = vmatpush1.bf16.msra.mxu0 0
        %569 = vmatprep.subr.bf16.mxu0 0
        %570 = vmatpush1.bf16.msra.mxu0 0
        %571 = vmatprep.subr.bf16.mxu0 0
        %572 = vmatpush1.bf16.msra.mxu0 0
        %573 = vmatprep.subr.bf16.mxu0 0
        %574 = vmatpush1.bf16.msra.mxu0 0
        %575 = vmatprep.subr.bf16.mxu0 0
        %576 = vmatpush1.bf16.msra.mxu0 0
        %577 = vmatprep.subr.bf16.mxu0 0
        %578 = vmatpush1.bf16.msra.mxu0 0
        %579 = vmatprep.subr.bf16.mxu0 0
        %580 = vmatpush1.bf16.msra.mxu0 0
        %581 = vmatprep.mubr.bf16.mxu0 0
        %582 = vmatmul.mubr.bf16.gmra.mrb[0].mxu0 %v477
        %v583 = vpop.f32.mrb[0].mxu0
        %v584 = vadd.f32 %v499, %v583
        %v585 = vpop.f32.mrb[0].mxu0
        %v586 = vpop.f32.mrb[0].mxu0
        %v587 = vpop.f32.mrb[0].mxu0
        %588 = vdwg.mxu0
        %vm589 = vcmask 80896
        %590 = vst.msk [vmem:[%s293] sm:$0xff] %vm589, %v584
        %s591 = sand.u32 %s184, 1
        %s592 = scalar_lea.sflag [#allocation4], %s591
        %s593 = sand.u32 %s184, 1
        %s594 = smul.addr %s593, 8
        %s595 = scalar_lea.vmem [#allocation5], %s594
        // Predicated region
        $region53: #{tpu_custom_call.1} parent=47 // pred_check
          %p596 = pneg %p194
        $region54: #{tpu_custom_call.1} parent=47 // pred_check_branch
          %598 = sbr.rel (%p596) target = $region56
        $region55: #{tpu_custom_call.1} parent=47 // pred_region
          %s600 = ssub.s32 128, 128
          %601 = vsyncadd %s592, %s600
          %s602 = smul.addr %s24, 128
          %s603 = scalar_lea.hbm %s7, %s602
          %s605 = sshll.u32 %s595, 4
          %s606 = int_to_ptr.vmem [resolvable:$true] %s605
          %608 = dma.vmem_to_hbm [thread:$0]  %s606, 128, %s603, %s592
        $region56: #{tpu_custom_call.1} parent=47 // pred_fallthru
          _
      $region48: #{tpu_custom_call.1} parent=5 // pred_fallthru
        _
      %p609 = scmp.le.s32.totalorder 2, %s19
      // Predicated region
      $region57: #{tpu_custom_call.1} parent=5 // pred_check
        %p610 = pneg %p609
      $region58: #{tpu_custom_call.1} parent=5 // pred_check_branch
        %612 = sbr.rel (%p610) target = $region60
      $region59: #{tpu_custom_call.1} parent=5 // pred_region
        %s613 = ssub.s32 %s19, 2
        // Predicated region
        $region61: #{tpu_custom_call.1} parent=59 // pred_check
          %p614 = pneg %p200
        $region62: #{tpu_custom_call.1} parent=59 // pred_check_branch
          %616 = sbr.rel (%p614) target = $region64
        $region63: #{tpu_custom_call.1} parent=59 // pred_region
          %s617 = sand.u32 %s185, 1
          %s618 = scalar_lea.sflag [#allocation4], %s617
          %s619 = sand.u32 %s185, 1
          %s620 = smul.addr %s619, 8
          %s621 = scalar_lea.vmem [#allocation5], %s620
          %622 = dma.done %s618, 128
        $region64: #{tpu_custom_call.1} parent=59 // pred_fallthru
          _
      $region60: #{tpu_custom_call.1} parent=5 // pred_fallthru
        _
    $region6: #{tpu_custom_call.1} parent=1 // loop_footer
      %s23 = sadd.s32 1, %s19
    $region7: #{tpu_custom_call.1} parent=1 // loop_footer_branch
      %18 = sbr.rel target = $region3
    $region8: #{tpu_custom_call.1} parent=1 // loop_exit
      _
    %623 = vsyncpa [#allocation3], 1
    %s624 = scalar_lea.sflag [#allocation3], 1
    %625 = vsyncpa %s624, 1
    %626 = vsyncpa [#allocation4], 1
    %s627 = scalar_lea.sflag [#allocation4], 1
    %628 = vsyncpa %s627, 1

</llo_original>
